<compile_context>
chip_gen: v7x
topology: tpu7x:2x2x1
jax: 0.10.0
libtpu: 0.0.40
codegen_flags: <defaults>
</compile_context>

<pallas_src>
import jax
import jax.numpy as jnp
from jax.experimental import pallas as pl
from jax.experimental.pallas import tpu as pltpu


def _round_up(x, m):
    return ((x + m - 1) // m) * m


def mlp_kernel(x_ref, w1_ref, b1_ref, w2_ref, b2_ref, w3_ref, b3_ref, o_ref):
    # In-kernel bf16 cast of the streamed x tile (HBM read stays f32; the cast
    # rides in free VPU slack under the HBM-bound roofline).
    xb = x_ref[...].astype(jnp.bfloat16)
    # Layer 1: (TB, D) bf16 @ (D, 16) bf16 -> f32 accumulator on the MXU.
    h1 = jnp.dot(xb, w1_ref[...], preferred_element_type=jnp.float32)
    h1 = jnp.maximum(h1 + b1_ref[...], 0.0)            # bias + ReLU on f32 (VPU)
    # Layer 2: (TB, 16) @ (16, 8) -> f32.
    h2 = jnp.dot(h1.astype(jnp.bfloat16), w2_ref[...],
                 preferred_element_type=jnp.float32)
    h2 = jnp.maximum(h2 + b2_ref[...], 0.0)
    # Layer 3: (TB, 8) @ (8, C) -> f32; narrow (C=num_classes) masked store.
    out = jnp.dot(h2.astype(jnp.bfloat16), w3_ref[...],
                  preferred_element_type=jnp.float32)
    o_ref[...] = (out + b3_ref[...]).astype(o_ref.dtype)


def classifier_forward(x, params, *, tb=8192):
    """x: (B, input_dim) float32. params: dict of pre-transposed (in, out) weights.

    Returns (B, num_classes) float32 logits.
    """
    B, D = x.shape
    C = params["w3"].shape[1]

    # Weights to bf16 (tiny arrays, negligible cost); biases stay f32 and are
    # added to the f32 accumulator in-kernel.
    w1 = params["w1"].astype(jnp.bfloat16)
    w2 = params["w2"].astype(jnp.bfloat16)
    w3 = params["w3"].astype(jnp.bfloat16)
    b1 = params["b1"].astype(jnp.float32).reshape(1, -1)
    b2 = params["b2"].astype(jnp.float32).reshape(1, -1)
    b3 = params["b3"].astype(jnp.float32).reshape(1, -1)

    # Batch tile: multiple of 8 sublanes; capped so there are >= 2 grid steps
    # whenever B allows it (v7x dual-core sharding of the "parallel" axis).
    tb_eff = _round_up(max(1, min(int(tb), B)), 8)
    half = _round_up(pl.cdiv(B, 2), 8)
    tb_eff = max(8, min(tb_eff, half))
    num_tiles = pl.cdiv(B, tb_eff)   # ragged last tile handled by Pallas

    grid_spec = pl.GridSpec(
        grid=(num_tiles,),
        in_specs=[
            pl.BlockSpec((tb_eff, D), lambda i: (i, 0)),   # x: streamed per tile
            pl.BlockSpec((D, 16), lambda i: (0, 0)),       # weights/biases: resident
            pl.BlockSpec((1, 16), lambda i: (0, 0)),
            pl.BlockSpec((16, 8), lambda i: (0, 0)),
            pl.BlockSpec((1, 8), lambda i: (0, 0)),
            pl.BlockSpec((8, C), lambda i: (0, 0)),
            pl.BlockSpec((1, C), lambda i: (0, 0)),
        ],
        out_specs=pl.BlockSpec((tb_eff, C), lambda i: (i, 0)),
    )

    out = pl.pallas_call(
        mlp_kernel,
        out_shape=jax.ShapeDtypeStruct((B, C), jnp.float32),
        grid_spec=grid_spec,
        compiler_params=pltpu.CompilerParams(
            dimension_semantics=("parallel",),
        ),
    )(x, w1, b1, w2, b2, w3, b3)

    return out


def init_params(key, input_dim, num_classes):
    """Deterministic synthetic parameters matching the nn.Sequential shapes.

    PyTorch nn.Linear stores weight as (out, in); we store the transpose
    (in, out) so the kernel does x @ W without an in-kernel transpose.
    """
    ks = jax.random.split(key, 6)

    def lin(kw, kb, fan_in, fan_out):
        bound = 1.0 / jnp.sqrt(fan_in)
        w = jax.random.uniform(kw, (fan_in, fan_out), jnp.float32, -bound, bound)
        b = jax.random.uniform(kb, (1, fan_out), jnp.float32, -bound, bound)
        return w, b

    w1, b1 = lin(ks[0], ks[1], input_dim, 16)
    w2, b2 = lin(ks[2], ks[3], 16, 8)
    w3, b3 = lin(ks[4], ks[5], 8, num_classes)
    return {"w1": w1, "b1": b1, "w2": w2, "b2": b2, "w3": w3, "b3": b3}


def reference_forward_f32(x, p):
    hp = jax.lax.Precision.HIGHEST
    h1 = jnp.maximum(jnp.dot(x, p["w1"], precision=hp) + p["b1"], 0.0)
    h2 = jnp.maximum(jnp.dot(h1, p["w2"], precision=hp) + p["b2"], 0.0)
    return jnp.dot(h2, p["w3"], precision=hp) + p["b3"]


def reference_forward_bf16(x, p):
    # Mirrors the kernel's bf16 rounding of inputs/weights/activations,
    # with f32 accumulation (what the MXU does).
    hp = jax.lax.Precision.HIGHEST
    bf = lambda a: a.astype(jnp.bfloat16).astype(jnp.float32)
    h1 = jnp.maximum(jnp.dot(bf(x), bf(p["w1"]), precision=hp) + p["b1"], 0.0)
    h2 = jnp.maximum(jnp.dot(bf(h1), bf(p["w2"]), precision=hp) + p["b2"], 0.0)
    return jnp.dot(bf(h2), bf(p["w3"]), precision=hp) + p["b3"]


if __name__ == "__main__":
    key = jax.random.PRNGKey(0)
    kx, kp = jax.random.split(key)

    batch = 200          # not a multiple of the tile -> exercises ragged last tile
    input_dim = 32       # == len(means) in the original module
    num_classes = 4      # == state_dict['network.4.bias'].shape[0]

    x = jax.random.normal(kx, (batch, input_dim), dtype=jnp.float32)
    params = init_params(kp, input_dim, num_classes)

    out = classifier_forward(x, params)
    out = jax.block_until_ready(out)

    assert out.shape == (batch, num_classes)

    ref_bf16 = reference_forward_bf16(x, params)
    ref_f32 = reference_forward_f32(x, params)
    # Tight check vs. a reference that mirrors the kernel's bf16 rounding.
    assert jnp.allclose(out, ref_bf16, atol=1e-3, rtol=1e-3)
    # Loose check vs. the pure-f32 module semantics (bf16 cast noise only).
    assert jnp.allclose(out, ref_f32, atol=5e-2, rtol=5e-2)

    print("KERNEL_OK")
</pallas_src>

<mosaic_0001>
module attributes {stable_mosaic.version = 11 : i64} {
  func.func @mlp_kernel(%arg0: i32, %arg1: memref<104x32xf32, #tpu.memory_space<vmem>>, %arg2: memref<32x16xbf16, #tpu.memory_space<vmem>>, %arg3: memref<1x16xf32, #tpu.memory_space<vmem>>, %arg4: memref<16x8xbf16, #tpu.memory_space<vmem>>, %arg5: memref<1x8xf32, #tpu.memory_space<vmem>>, %arg6: memref<8x4xbf16, #tpu.memory_space<vmem>>, %arg7: memref<1x4xf32, #tpu.memory_space<vmem>>, %arg8: memref<104x4xf32, #tpu.memory_space<vmem>>) attributes {dimension_semantics = [#tpu.dimension_semantics<parallel>], iteration_bounds = array<i64: 2>, scalar_prefetch = 0 : i64, scratch_operands = 0 : i64, tpu.core_type = #tpu.core_type<tc>, window_params = [{transform_indices = @transform_0, window_bounds = array<i64: 104, 32>}, {pipeline_mode = #tpu.pipeline_mode<synchronous>, transform_indices = @transform_1, window_bounds = array<i64: 32, 16>}, {pipeline_mode = #tpu.pipeline_mode<synchronous>, transform_indices = @transform_2, window_bounds = array<i64: 1, 16>}, {pipeline_mode = #tpu.pipeline_mode<synchronous>, transform_indices = @transform_3, window_bounds = array<i64: 16, 8>}, {pipeline_mode = #tpu.pipeline_mode<synchronous>, transform_indices = @transform_4, window_bounds = array<i64: 1, 8>}, {pipeline_mode = #tpu.pipeline_mode<synchronous>, transform_indices = @transform_5, window_bounds = array<i64: 8, 4>}, {pipeline_mode = #tpu.pipeline_mode<synchronous>, transform_indices = @transform_6, window_bounds = array<i64: 1, 4>}, {transform_indices = @transform_7, window_bounds = array<i64: 104, 4>}]} {
    %c0 = arith.constant 0 : index
    %c0_0 = arith.constant 0 : index
    %0 = vector.load %arg1[%c0, %c0_0] : memref<104x32xf32, #tpu.memory_space<vmem>>, vector<104x32xf32>
    %1 = arith.truncf %0 : vector<104x32xf32> to vector<104x32xbf16>
    %c0_1 = arith.constant 0 : index
    %c0_2 = arith.constant 0 : index
    %2 = vector.load %arg2[%c0_1, %c0_2] : memref<32x16xbf16, #tpu.memory_space<vmem>>, vector<32x16xbf16>
    %cst = arith.constant dense<0.000000e+00> : vector<104x16xf32>
    %3 = tpu.matmul %1, %2, %cst {dimension_numbers = #tpu.dot_dimension_numbers<[1], [0], [0], [1], [0, 0, 1, 1], [], []>} : vector<104x32xbf16>, vector<32x16xbf16>, vector<104x16xf32> -> vector<104x16xf32>
    %c0_3 = arith.constant 0 : index
    %c0_4 = arith.constant 0 : index
    %4 = vector.load %arg3[%c0_3, %c0_4] : memref<1x16xf32, #tpu.memory_space<vmem>>, vector<1x16xf32>
    %5 = vector.broadcast %4 : vector<1x16xf32> to vector<104x16xf32>
    %6 = arith.addf %3, %5 : vector<104x16xf32>
    %cst_5 = arith.constant 0.000000e+00 : f32
    %7 = vector.broadcast %cst_5 : f32 to vector<104x16xf32>
    %8 = arith.maximumf %6, %7 : vector<104x16xf32>
    %9 = arith.truncf %8 : vector<104x16xf32> to vector<104x16xbf16>
    %c0_6 = arith.constant 0 : index
    %c0_7 = arith.constant 0 : index
    %10 = vector.load %arg4[%c0_6, %c0_7] : memref<16x8xbf16, #tpu.memory_space<vmem>>, vector<16x8xbf16>
    %cst_8 = arith.constant dense<0.000000e+00> : vector<104x8xf32>
    %11 = tpu.matmul %9, %10, %cst_8 {dimension_numbers = #tpu.dot_dimension_numbers<[1], [0], [0], [1], [0, 0, 1, 1], [], []>} : vector<104x16xbf16>, vector<16x8xbf16>, vector<104x8xf32> -> vector<104x8xf32>
    %c0_9 = arith.constant 0 : index
    %c0_10 = arith.constant 0 : index
    %12 = vector.load %arg5[%c0_9, %c0_10] : memref<1x8xf32, #tpu.memory_space<vmem>>, vector<1x8xf32>
    %13 = vector.broadcast %12 : vector<1x8xf32> to vector<104x8xf32>
    %14 = arith.addf %11, %13 : vector<104x8xf32>
    %cst_11 = arith.constant 0.000000e+00 : f32
    %15 = vector.broadcast %cst_11 : f32 to vector<104x8xf32>
    %16 = arith.maximumf %14, %15 : vector<104x8xf32>
    %17 = arith.truncf %16 : vector<104x8xf32> to vector<104x8xbf16>
    %c0_12 = arith.constant 0 : index
    %c0_13 = arith.constant 0 : index
    %18 = vector.load %arg6[%c0_12, %c0_13] : memref<8x4xbf16, #tpu.memory_space<vmem>>, vector<8x4xbf16>
    %cst_14 = arith.constant dense<0.000000e+00> : vector<104x4xf32>
    %19 = tpu.matmul %17, %18, %cst_14 {dimension_numbers = #tpu.dot_dimension_numbers<[1], [0], [0], [1], [0, 0, 1, 1], [], []>} : vector<104x8xbf16>, vector<8x4xbf16>, vector<104x4xf32> -> vector<104x4xf32>
    %c0_15 = arith.constant 0 : index
    %c0_16 = arith.constant 0 : index
    %20 = vector.load %arg7[%c0_15, %c0_16] : memref<1x4xf32, #tpu.memory_space<vmem>>, vector<1x4xf32>
    %21 = vector.broadcast %20 : vector<1x4xf32> to vector<104x4xf32>
    %22 = arith.addf %19, %21 : vector<104x4xf32>
    %c0_17 = arith.constant 0 : index
    %c0_18 = arith.constant 0 : index
    %23 = vector.load %arg8[%c0_17, %c0_18] : memref<104x4xf32, #tpu.memory_space<vmem>>, vector<104x4xf32>
    tpu.vector_store %arg8[%c0_17, %c0_18], %22 {strides = array<i32>} : memref<104x4xf32, #tpu.memory_space<vmem>>, vector<104x4xf32>,
    return
  }
  func.func @transform_0(%arg0: i32) -> (i32, i32) {
    %c0_i32 = arith.constant 0 : i32
    %c0_i32_0 = arith.constant 0 : i32
    return %arg0, %c0_i32 : i32, i32
  }
  func.func @transform_1(%arg0: i32) -> (i32, i32) {
    %c0_i32 = arith.constant 0 : i32
    %c0_i32_0 = arith.constant 0 : i32
    %c0_i32_1 = arith.constant 0 : i32
    return %c0_i32, %c0_i32_0 : i32, i32
  }
  func.func @transform_2(%arg0: i32) -> (i32, i32) {
    %c0_i32 = arith.constant 0 : i32
    %c0_i32_0 = arith.constant 0 : i32
    %c0_i32_1 = arith.constant 0 : i32
    return %c0_i32, %c0_i32_0 : i32, i32
  }
  func.func @transform_3(%arg0: i32) -> (i32, i32) {
    %c0_i32 = arith.constant 0 : i32
    %c0_i32_0 = arith.constant 0 : i32
    %c0_i32_1 = arith.constant 0 : i32
    return %c0_i32, %c0_i32_0 : i32, i32
  }
  func.func @transform_4(%arg0: i32) -> (i32, i32) {
    %c0_i32 = arith.constant 0 : i32
    %c0_i32_0 = arith.constant 0 : i32
    %c0_i32_1 = arith.constant 0 : i32
    return %c0_i32, %c0_i32_0 : i32, i32
  }
  func.func @transform_5(%arg0: i32) -> (i32, i32) {
    %c0_i32 = arith.constant 0 : i32
    %c0_i32_0 = arith.constant 0 : i32
    %c0_i32_1 = arith.constant 0 : i32
    return %c0_i32, %c0_i32_0 : i32, i32
  }
  func.func @transform_6(%arg0: i32) -> (i32, i32) {
    %c0_i32 = arith.constant 0 : i32
    %c0_i32_0 = arith.constant 0 : i32
    %c0_i32_1 = arith.constant 0 : i32
    return %c0_i32, %c0_i32_0 : i32, i32
  }
  func.func @transform_7(%arg0: i32) -> (i32, i32) {
    %c0_i32 = arith.constant 0 : i32
    %c0_i32_0 = arith.constant 0 : i32
    return %arg0, %c0_i32 : i32, i32
  }
}

</mosaic_0001>

<llo_original>
// kernel: tpu_custom_call.1
$region0: #{tpu_custom_call.1}
  #allocation0 [shape = 'u32[]', space=smem, size = 0x4, offset = 0x4, fixed_abs, tag = 'smem constant byte address 0x4 - core index']
  #allocation1 [shape = 'u32[144,128]{1,0:T(1,128)}', space=vmem, size = 0x12000, scoped, tag = 'internal scratch']
  %s0 = inlined_call_operand.vmem [shape: f32[200,32], index: 0, kind: input, shape index: {}]
  %s1 = inlined_call_operand.vmem [shape: bf16[32,16], index: 1, kind: input, shape index: {}]
  %s2 = inlined_call_operand.vmem [shape: f32[1,16], index: 2, kind: input, shape index: {}]
  %s3 = inlined_call_operand.vmem [shape: bf16[16,8], index: 3, kind: input, shape index: {}]
  %s4 = inlined_call_operand.vmem [shape: f32[1,8], index: 4, kind: input, shape index: {}]
  %s5 = inlined_call_operand.vmem [shape: bf16[8,4], index: 5, kind: input, shape index: {}]
  %s6 = inlined_call_operand.vmem [shape: f32[1,4], index: 6, kind: input, shape index: {}]
  %s7 = inlined_call_operand.vmem [shape: f32[200,4], index: 7, kind: output, shape index: {}]
  %s8 = sld [smem:[#allocation0]]
  $region109: #{tpu_custom_call.1} parent=0
    _
  %s10 = ssub.s32 1, %s8
  %s11 = scalar_select 0, %s10, %s8
  $region1: #{tpu_custom_call.1} parent=0
    #allocation2 [shape = 'u8[106496]{0}', space=vmem, size = 0x1a000, scoped, tag = 'output window, operand 0']
    loop: start=0, step=1, limit=4
    $region2: #{tpu_custom_call.1} parent=1 // loop_pre_header
      _
    $region3: #{tpu_custom_call.1} parent=1 // loop_header
      %s13 = sphi 0, %s17
      %p14 = scmp.ge.s32.totalorder %s13, 4
      %s23 = sphi 0, %s25
      %s26 = sphi 0, %s23
      %s27 = sphi 0, %s26
      %s43 = sphi 0, %s27
      %s47 = sphi 0, %s47
      %s49 = sphi 0, %s47
      %s50 = sphi 0, %s49
      %s64 = sphi 0, %s50
      %s68 = sphi 0, %s68
      %s70 = sphi 0, %s68
      %s71 = sphi 0, %s70
      %s85 = sphi 0, %s71
      %s89 = sphi 0, %s89
      %s91 = sphi 0, %s89
      %s92 = sphi 0, %s91
      %s106 = sphi 0, %s92
      %s110 = sphi 0, %s110
      %s112 = sphi 0, %s110
      %s113 = sphi 0, %s112
      %s127 = sphi 0, %s113
      %s131 = sphi 0, %s131
      %s133 = sphi 0, %s131
      %s134 = sphi 0, %s133
      %s148 = sphi 0, %s134
      %s152 = sphi 0, %s152
      %s154 = sphi 0, %s152
      %s155 = sphi 0, %s154
      %s169 = sphi 0, %s155
      %s175 = sphi 0, %s177
      %s178 = sphi 0, %s175
      %s179 = sphi 0, %s178
      %s195 = sphi 0, %s179
    $region4: #{tpu_custom_call.1} parent=1 // loop_header_branch
      %16 = sbr.rel (%p14) target = $region8
    $region5: #{tpu_custom_call.1} parent=1 // loop_body
      %s18 = ssub.s32 %s13, 1
      %s19 = ssub.s32 %s13, 2
      %s20 = sadd.s32 %s13, 1
      %s21 = ssub.s32 %s13, %s20
      %p22 = scmp.eq.s32.totalorder %s21, 0
      %s24 = sadd.s32 %s23, 1
      %s25 = scalar_select %p22, %s23, %s24
      %p28 = pneg %p22
      %p29 = scmp.eq.s32.totalorder %s13, 1
      %p30 = por %p28, %p29
      %p31 = scmp.ne.s32.totalorder %s23, %s26
      %p32 = scmp.eq.s32.totalorder %s13, 0
      %p33 = por %p31, %p32
      %p34 = scmp.ne.s32.totalorder %s23, %s26
      %p35 = scmp.eq.s32.totalorder %s18, 1
      %p36 = por %p34, %p35
      %p37 = scmp.ne.s32.totalorder %s26, %s27
      %p38 = scmp.eq.s32.totalorder %s18, 0
      %p39 = por %p37, %p38
      %p40 = scmp.ne.s32.totalorder %s26, %s27
      %p41 = scmp.eq.s32.totalorder %s19, 1
      %p42 = por %p40, %p41
      %p44 = scmp.ne.s32.totalorder %s27, %s43
      %p45 = scmp.eq.s32.totalorder %s19, 0
      %p46 = por %p44, %p45
      %s48 = sadd.s32 %s47, 1
      %p51 = scmp.eq.s32.totalorder %s13, 1
      %p52 = scmp.ne.s32.totalorder %s47, %s49
      %p53 = scmp.eq.s32.totalorder %s13, 0
      %p54 = por %p52, %p53
      %p55 = scmp.ne.s32.totalorder %s47, %s49
      %p56 = scmp.eq.s32.totalorder %s18, 1
      %p57 = por %p55, %p56
      %p58 = scmp.ne.s32.totalorder %s49, %s50
      %p59 = scmp.eq.s32.totalorder %s18, 0
      %p60 = por %p58, %p59
      %p61 = scmp.ne.s32.totalorder %s49, %s50
      %p62 = scmp.eq.s32.totalorder %s19, 1
      %p63 = por %p61, %p62
      %p65 = scmp.ne.s32.totalorder %s50, %s64
      %p66 = scmp.eq.s32.totalorder %s19, 0
      %p67 = por %p65, %p66
      %s69 = sadd.s32 %s68, 1
      %p72 = scmp.eq.s32.totalorder %s13, 1
      %p73 = scmp.ne.s32.totalorder %s68, %s70
      %p74 = scmp.eq.s32.totalorder %s13, 0
      %p75 = por %p73, %p74
      %p76 = scmp.ne.s32.totalorder %s68, %s70
      %p77 = scmp.eq.s32.totalorder %s18, 1
      %p78 = por %p76, %p77
      %p79 = scmp.ne.s32.totalorder %s70, %s71
      %p80 = scmp.eq.s32.totalorder %s18, 0
      %p81 = por %p79, %p80
      %p82 = scmp.ne.s32.totalorder %s70, %s71
      %p83 = scmp.eq.s32.totalorder %s19, 1
      %p84 = por %p82, %p83
      %p86 = scmp.ne.s32.totalorder %s71, %s85
      %p87 = scmp.eq.s32.totalorder %s19, 0
      %p88 = por %p86, %p87
      %s90 = sadd.s32 %s89, 1
      %p93 = scmp.eq.s32.totalorder %s13, 1
      %p94 = scmp.ne.s32.totalorder %s89, %s91
      %p95 = scmp.eq.s32.totalorder %s13, 0
      %p96 = por %p94, %p95
      %p97 = scmp.ne.s32.totalorder %s89, %s91
      %p98 = scmp.eq.s32.totalorder %s18, 1
      %p99 = por %p97, %p98
      %p100 = scmp.ne.s32.totalorder %s91, %s92
      %p101 = scmp.eq.s32.totalorder %s18, 0
      %p102 = por %p100, %p101
      %p103 = scmp.ne.s32.totalorder %s91, %s92
      %p104 = scmp.eq.s32.totalorder %s19, 1
      %p105 = por %p103, %p104
      %p107 = scmp.ne.s32.totalorder %s92, %s106
      %p108 = scmp.eq.s32.totalorder %s19, 0
      %p109 = por %p107, %p108
      %s111 = sadd.s32 %s110, 1
      %p114 = scmp.eq.s32.totalorder %s13, 1
      %p115 = scmp.ne.s32.totalorder %s110, %s112
      %p116 = scmp.eq.s32.totalorder %s13, 0
      %p117 = por %p115, %p116
      %p118 = scmp.ne.s32.totalorder %s110, %s112
      %p119 = scmp.eq.s32.totalorder %s18, 1
      %p120 = por %p118, %p119
      %p121 = scmp.ne.s32.totalorder %s112, %s113
      %p122 = scmp.eq.s32.totalorder %s18, 0
      %p123 = por %p121, %p122
      %p124 = scmp.ne.s32.totalorder %s112, %s113
      %p125 = scmp.eq.s32.totalorder %s19, 1
      %p126 = por %p124, %p125
      %p128 = scmp.ne.s32.totalorder %s113, %s127
      %p129 = scmp.eq.s32.totalorder %s19, 0
      %p130 = por %p128, %p129
      %s132 = sadd.s32 %s131, 1
      %p135 = scmp.eq.s32.totalorder %s13, 1
      %p136 = scmp.ne.s32.totalorder %s131, %s133
      %p137 = scmp.eq.s32.totalorder %s13, 0
      %p138 = por %p136, %p137
      %p139 = scmp.ne.s32.totalorder %s131, %s133
      %p140 = scmp.eq.s32.totalorder %s18, 1
      %p141 = por %p139, %p140
      %p142 = scmp.ne.s32.totalorder %s133, %s134
      %p143 = scmp.eq.s32.totalorder %s18, 0
      %p144 = por %p142, %p143
      %p145 = scmp.ne.s32.totalorder %s133, %s134
      %p146 = scmp.eq.s32.totalorder %s19, 1
      %p147 = por %p145, %p146
      %p149 = scmp.ne.s32.totalorder %s134, %s148
      %p150 = scmp.eq.s32.totalorder %s19, 0
      %p151 = por %p149, %p150
      %s153 = sadd.s32 %s152, 1
      %p156 = scmp.eq.s32.totalorder %s13, 1
      %p157 = scmp.ne.s32.totalorder %s152, %s154
      %p158 = scmp.eq.s32.totalorder %s13, 0
      %p159 = por %p157, %p158
      %p160 = scmp.ne.s32.totalorder %s152, %s154
      %p161 = scmp.eq.s32.totalorder %s18, 1
      %p162 = por %p160, %p161
      %p163 = scmp.ne.s32.totalorder %s154, %s155
      %p164 = scmp.eq.s32.totalorder %s18, 0
      %p165 = por %p163, %p164
      %p166 = scmp.ne.s32.totalorder %s154, %s155
      %p167 = scmp.eq.s32.totalorder %s19, 1
      %p168 = por %p166, %p167
      %p170 = scmp.ne.s32.totalorder %s155, %s169
      %p171 = scmp.eq.s32.totalorder %s19, 0
      %p172 = por %p170, %p171
      %s173 = ssub.s32 %s13, %s20
      %p174 = scmp.eq.s32.totalorder %s173, 0
      %s176 = sadd.s32 %s175, 1
      %s177 = scalar_select %p174, %s175, %s176
      %p180 = pneg %p174
      %p181 = scmp.eq.s32.totalorder %s13, 1
      %p182 = por %p180, %p181
      %p183 = scmp.ne.s32.totalorder %s175, %s178
      %p184 = scmp.eq.s32.totalorder %s13, 0
      %p185 = por %p183, %p184
      %p186 = scmp.ne.s32.totalorder %s175, %s178
      %p187 = scmp.eq.s32.totalorder %s18, 1
      %p188 = por %p186, %p187
      %p189 = scmp.ne.s32.totalorder %s178, %s179
      %p190 = scmp.eq.s32.totalorder %s18, 0
      %p191 = por %p189, %p190
      %p192 = scmp.ne.s32.totalorder %s178, %s179
      %p193 = scmp.eq.s32.totalorder %s19, 1
      %p194 = por %p192, %p193
      %p196 = scmp.ne.s32.totalorder %s179, %s195
      %p197 = scmp.eq.s32.totalorder %s19, 0
      %p198 = por %p196, %p197
      %p199 = scmp.le.s32.totalorder 1, %s13
      %p200 = scmp.lt.s32.totalorder %s13, 3
      %p201 = pnand %p199, %p200
      %p202 = pneg %p201
      // Predicated region
      $region9: #{tpu_custom_call.1} parent=5 // pred_check
        _
      $region10: #{tpu_custom_call.1} parent=5 // pred_check_branch
        %204 = sbr.rel (%p201) target = $region12
      $region11: #{tpu_custom_call.1} parent=5 // pred_region
        %s205 = ssub.s32 %s13, 1
        // Predicated region
        $region13: #{tpu_custom_call.1} parent=11 // pred_check
          %p206 = pneg %p60
        $region14: #{tpu_custom_call.1} parent=11 // pred_check_branch
          %208 = sbr.rel (%p206) target = $region16
        $region15: #{tpu_custom_call.1} parent=11 // pred_region
          _
        $region16: #{tpu_custom_call.1} parent=11 // pred_fallthru
          _
        // Predicated region
        $region17: #{tpu_custom_call.1} parent=11 // pred_check
          %p209 = pneg %p81
        $region18: #{tpu_custom_call.1} parent=11 // pred_check_branch
          %211 = sbr.rel (%p209) target = $region20
        $region19: #{tpu_custom_call.1} parent=11 // pred_region
          _
        $region20: #{tpu_custom_call.1} parent=11 // pred_fallthru
          _
        // Predicated region
        $region21: #{tpu_custom_call.1} parent=11 // pred_check
          %p212 = pneg %p102
        $region22: #{tpu_custom_call.1} parent=11 // pred_check_branch
          %214 = sbr.rel (%p212) target = $region24
        $region23: #{tpu_custom_call.1} parent=11 // pred_region
          _
        $region24: #{tpu_custom_call.1} parent=11 // pred_fallthru
          _
        // Predicated region
        $region25: #{tpu_custom_call.1} parent=11 // pred_check
          %p215 = pneg %p123
        $region26: #{tpu_custom_call.1} parent=11 // pred_check_branch
          %217 = sbr.rel (%p215) target = $region28
        $region27: #{tpu_custom_call.1} parent=11 // pred_region
          _
        $region28: #{tpu_custom_call.1} parent=11 // pred_fallthru
          _
        // Predicated region
        $region29: #{tpu_custom_call.1} parent=11 // pred_check
          %p218 = pneg %p144
        $region30: #{tpu_custom_call.1} parent=11 // pred_check_branch
          %220 = sbr.rel (%p218) target = $region32
        $region31: #{tpu_custom_call.1} parent=11 // pred_region
          _
        $region32: #{tpu_custom_call.1} parent=11 // pred_fallthru
          _
        // Predicated region
        $region33: #{tpu_custom_call.1} parent=11 // pred_check
          %p221 = pneg %p165
        $region34: #{tpu_custom_call.1} parent=11 // pred_check_branch
          %223 = sbr.rel (%p221) target = $region36
        $region35: #{tpu_custom_call.1} parent=11 // pred_region
          _
        $region36: #{tpu_custom_call.1} parent=11 // pred_fallthru
          _
      $region12: #{tpu_custom_call.1} parent=5 // pred_fallthru
        _
      %p224 = scmp.lt.s32.totalorder %s13, 2
      // Predicated region
      $region37: #{tpu_custom_call.1} parent=5 // pred_check
        %p225 = pneg %p224
      $region38: #{tpu_custom_call.1} parent=5 // pred_check_branch
        %227 = sbr.rel (%p225) target = $region40
      $region39: #{tpu_custom_call.1} parent=5 // pred_region
        // Predicated region
        $region41: #{tpu_custom_call.1} parent=39 // pred_check
          %p228 = pneg %p33
        $region42: #{tpu_custom_call.1} parent=39 // pred_check_branch
          %230 = sbr.rel (%p228) target = $region44
        $region43: #{tpu_custom_call.1} parent=39 // pred_region
          %s231 = smul.u32 13, %s13
          %s232 = ssub.s32 25, %s231
          %p233 = scmp.lt.s32.totalorder %s232, 13
          %s234 = scalar_select %p233, %s232, 13
          %s235 = smul.u32 128, %s234
          %p236 = scmp.lt.s32.totalorder %s231, 24
          %s237 = scalar_select %p236, %s231, 24
          %s238 = smul.addr %s237, 8
          %s239 = scalar_lea.vmem %s0, %s238
          %s240 = smul.u32 13, %s13
          %s241 = ssub.s32 25, %s240
          %p242 = scmp.lt.s32.totalorder %s241, 13
          %s243 = scalar_select %p242, %s241, 13
          %s244 = smul.u32 128, %s243
        $region44: #{tpu_custom_call.1} parent=39 // pred_fallthru
          _
      $region40: #{tpu_custom_call.1} parent=5 // pred_fallthru
        _
      %p245 = scmp.le.s32.totalorder 1, %s13
      %p246 = scmp.lt.s32.totalorder %s13, 3
      %p247 = pnand %p245, %p246
      %p248 = pneg %p247
      // Predicated region
      $region45: #{tpu_custom_call.1} parent=5 // pred_check
        _
      $region46: #{tpu_custom_call.1} parent=5 // pred_check_branch
        %250 = sbr.rel (%p247) target = $region48
      $region47: #{tpu_custom_call.1} parent=5 // pred_region
        %s251 = ssub.s32 %s13, 1
        %s252 = smul.u32 13, %s18
        %s253 = ssub.s32 25, %s252
        %p254 = scmp.lt.s32.totalorder %s253, 13
        %s255 = scalar_select %p254, %s253, 13
        %s256 = smul.u32 128, %s255
        %p257 = scmp.lt.s32.totalorder %s252, 24
        %s258 = scalar_select %p257, %s252, 24
        %s259 = smul.addr %s258, 8
        %s260 = scalar_lea.vmem %s0, %s259
        %p261 = pneg %p39
        %p262 = pneg %p36
        %p263 = pneg %p60
        %p264 = pneg %p57
        %p265 = pneg %p81
        %p266 = pneg %p78
        %p267 = pneg %p102
        %p268 = pneg %p99
        %p269 = pneg %p123
        %p270 = pneg %p120
        %p271 = pneg %p144
        %p272 = pneg %p141
        %p273 = pneg %p165
        %p274 = pneg %p162
        %p275 = pneg %p191
        %p276 = pneg %p188
        %s277 = sand.u32 %s178, 1
        %s278 = sand.u32 %s178, 1
        %s279 = smul.addr %s278, 104
        %s280 = scalar_lea.vmem [#allocation2], %s279
        %s281 = smul.u32 13, %s18
        %s282 = ssub.s32 25, %s281
        %p283 = scmp.lt.s32.totalorder %s282, 13
        %s284 = scalar_select %p283, %s282, 13
        %s285 = smul.u32 128, %s284
        %p286 = scmp.lt.s32.totalorder %s281, 24
        %s287 = scalar_select %p286, %s281, 24
        %s288 = smul.addr %s287, 8
        %s289 = scalar_lea.vmem %s0, %s288
        %s290 = smul.u32 13, %s18
        %s291 = ssub.s32 25, %s290
        %p292 = scmp.lt.s32.totalorder %s291, 13
        %s293 = scalar_select %p292, %s291, 13
        %s294 = smul.u32 128, %s293
        %s295 = smul.u32 13, %s18
        %s296 = ssub.s32 25, %s295
        %p297 = scmp.lt.s32.totalorder %s296, 13
        %s298 = scalar_select %p297, %s296, 13
        %s299 = smul.u32 128, %s298
        %v301 = vld [vmem:[%s289] sm:$0xff]
        %v302 = vld [vmem:[%s289 + $0x8] sm:$0xff]
        %v303 = vld [vmem:[%s289 + $0x10] sm:$0xff]
        %v304 = vld [vmem:[%s289 + $0x18] sm:$0xff]
        %v305 = vld [vmem:[%s289 + $0x20] sm:$0xff]
        %v306 = vld [vmem:[%s289 + $0x28] sm:$0xff]
        %v307 = vld [vmem:[%s289 + $0x30] sm:$0xff]
        %v308 = vld [vmem:[%s289 + $0x38] sm:$0xff]
        %v309 = vld [vmem:[%s289 + $0x40] sm:$0xff]
        %v310 = vld [vmem:[%s289 + $0x48] sm:$0xff]
        %v311 = vld [vmem:[%s289 + $0x50] sm:$0xff]
        %v312 = vld [vmem:[%s289 + $0x58] sm:$0xff]
        %v313 = vld [vmem:[%s289 + $0x60] sm:$0xff]
        %v314 = vpack.c.bf16 %v302, %v301
        %v315 = vpack.c.bf16 %v304, %v303
        %v316 = vpack.c.bf16 %v306, %v305
        %v317 = vpack.c.bf16 %v308, %v307
        %v318 = vpack.c.bf16 %v310, %v309
        %v319 = vpack.c.bf16 %v312, %v311
        %v320 = vpack.c.bf16 %v313, %v313
        %v321 = vld [vmem:[%s1] sm:$0xf]
        %v322 = vld [vmem:[%s1 + $0x4] sm:$0xf]
        %v323 = vld [vmem:[%s1 + $0x8] sm:$0xf]
        %v324 = vld [vmem:[%s1 + $0xc] sm:$0xf]
        %v325 = vld [vmem:[%s2] sm:$0x1]
        %v327 = vlaneseq
        %v328 = vshrl.u32 %v327, 7
        %v329 = vsub.s32 0, %v328
        %v330 = vrot.slane %v325, %v329
        %v336 = vunpack.c.l.b16 %v321
        %v337 = vunpack.c.l.b16 %v322
        %v338 = vunpack.c.l.b16 %v323
        %v339 = vunpack.c.l.b16 %v324
        %v340 = vpack.c.b16 %v337, %v336
        %v341 = vpack.c.b16 %v339, %v338
        %vm344 = vcmask 261120
        %v346 = vsel %vm344, %v314, 0
        %v349 = vsel %vm344, %v315, 0
        %v352 = vsel %vm344, %v316, 0
        %v355 = vsel %vm344, %v317, 0
        %v358 = vsel %vm344, %v318, 0
        %v361 = vsel %vm344, %v319, 0
        %v364 = vsel %vm344, %v320, 0
        %366 = vmatprep.subr.bf16.mxu0 0
        %367 = vmatpush1.bf16.msra.mxu0 %v340
        %368 = vmatprep.subr.bf16.mxu0 0
        %369 = vmatpush1.bf16.msra.mxu0 %v341
        %370 = vmatprep.subr.bf16.mxu0 0
        %371 = vmatpush1.bf16.msra.mxu0 0
        %372 = vmatprep.subr.bf16.mxu0 0
        %373 = vmatpush1.bf16.msra.mxu0 0
        %374 = vmatprep.subr.bf16.mxu0 0
        %375 = vmatpush1.bf16.msra.mxu0 0
        %376 = vmatprep.subr.bf16.mxu0 0
        %377 = vmatpush1.bf16.msra.mxu0 0
        %378 = vmatprep.subr.bf16.mxu0 0
        %379 = vmatpush1.bf16.msra.mxu0 0
        %380 = vmatprep.subr.bf16.mxu0 0
        %381 = vmatpush1.bf16.msra.mxu0 0
        %382 = vmatprep.subr.bf16.mxu0 0
        %383 = vmatpush1.bf16.msra.mxu0 0
        %384 = vmatprep.subr.bf16.mxu0 0
        %385 = vmatpush1.bf16.msra.mxu0 0
        %386 = vmatprep.subr.bf16.mxu0 0
        %387 = vmatpush1.bf16.msra.mxu0 0
        %388 = vmatprep.subr.bf16.mxu0 0
        %389 = vmatpush1.bf16.msra.mxu0 0
        %390 = vmatprep.subr.bf16.mxu0 0
        %391 = vmatpush1.bf16.msra.mxu0 0
        %392 = vmatprep.subr.bf16.mxu0 0
        %393 = vmatpush1.bf16.msra.mxu0 0
        %394 = vmatprep.subr.bf16.mxu0 0
        %395 = vmatpush1.bf16.msra.mxu0 0
        %396 = vmatprep.subr.bf16.mxu0 0
        %397 = vmatpush1.bf16.msra.mxu0 0
        %398 = vmatprep.mubr.bf16.mxu0 0
        %399 = vmatmul.mubr.bf16.gmra.mrb[0].mxu0 %v346
        %v400 = vpop.f32.mrb[0].mxu0
        %v401 = vadd.f32 %v330, %v400
        %v402 = vpop.f32.mrb[0].mxu0
        %v403 = vpop.f32.mrb[0].mxu0
        %v404 = vadd.f32 %v330, %v403
        %v405 = vpop.f32.mrb[0].mxu0
        %406 = vmatprep.mubr.bf16.mxu0 0
        %407 = vmatmul.mubr.bf16.gmra.mrb[0].mxu0 %v349
        %v408 = vpop.f32.mrb[0].mxu0
        %v409 = vadd.f32 %v330, %v408
        %v410 = vpop.f32.mrb[0].mxu0
        %v411 = vpop.f32.mrb[0].mxu0
        %v412 = vadd.f32 %v330, %v411
        %v413 = vpop.f32.mrb[0].mxu0
        %414 = vmatprep.mubr.bf16.mxu0 0
        %415 = vmatmul.mubr.bf16.gmra.mrb[0].mxu0 %v352
        %v416 = vpop.f32.mrb[0].mxu0
        %v417 = vadd.f32 %v330, %v416
        %v418 = vpop.f32.mrb[0].mxu0
        %v419 = vpop.f32.mrb[0].mxu0
        %v420 = vadd.f32 %v330, %v419
        %v421 = vpop.f32.mrb[0].mxu0
        %422 = vmatprep.mubr.bf16.mxu0 0
        %423 = vmatmul.mubr.bf16.gmra.mrb[0].mxu0 %v355
        %v424 = vpop.f32.mrb[0].mxu0
        %v425 = vadd.f32 %v330, %v424
        %v426 = vpop.f32.mrb[0].mxu0
        %v427 = vpop.f32.mrb[0].mxu0
        %v428 = vadd.f32 %v330, %v427
        %v429 = vpop.f32.mrb[0].mxu0
        %430 = vmatprep.mubr.bf16.mxu0 0
        %431 = vmatmul.mubr.bf16.gmra.mrb[0].mxu0 %v358
        %v432 = vpop.f32.mrb[0].mxu0
        %v433 = vadd.f32 %v330, %v432
        %v434 = vpop.f32.mrb[0].mxu0
        %v435 = vpop.f32.mrb[0].mxu0
        %v436 = vadd.f32 %v330, %v435
        %v437 = vpop.f32.mrb[0].mxu0
        %438 = vmatprep.mubr.bf16.mxu0 0
        %439 = vmatmul.mubr.bf16.gmra.mrb[0].mxu0 %v361
        %v440 = vpop.f32.mrb[0].mxu0
        %v441 = vadd.f32 %v330, %v440
        %v442 = vpop.f32.mrb[0].mxu0
        %v443 = vpop.f32.mrb[0].mxu0
        %v444 = vadd.f32 %v330, %v443
        %v445 = vpop.f32.mrb[0].mxu0
        %446 = vmatprep.mubr.bf16.mxu0 0
        %447 = vmatmul.mubr.bf16.gmra.mrb[0].mxu0 %v364
        %v448 = vpop.f32.mrb[0].mxu0
        %v449 = vadd.f32 %v330, %v448
        %v450 = vpop.f32.mrb[0].mxu0
        %v451 = vpop.f32.mrb[0].mxu0
        %v452 = vpop.f32.mrb[0].mxu0
        %453 = vdwg.mxu0
        %v454 = vmax.f32 %v401, 0.0
        %v455 = vmax.f32 %v404, 0.0
        %v456 = vmax.f32 %v409, 0.0
        %v457 = vmax.f32 %v412, 0.0
        %v458 = vmax.f32 %v417, 0.0
        %v459 = vmax.f32 %v420, 0.0
        %v460 = vmax.f32 %v425, 0.0
        %v461 = vmax.f32 %v428, 0.0
        %v462 = vmax.f32 %v433, 0.0
        %v463 = vmax.f32 %v436, 0.0
        %v464 = vmax.f32 %v441, 0.0
        %v465 = vmax.f32 %v444, 0.0
        %v466 = vmax.f32 %v449, 0.0
        %v467 = vpack.c.bf16 %v455, %v454
        %v468 = vpack.c.bf16 %v457, %v456
        %v469 = vpack.c.bf16 %v459, %v458
        %v470 = vpack.c.bf16 %v461, %v460
        %v471 = vpack.c.bf16 %v463, %v462
        %v472 = vpack.c.bf16 %v465, %v464
        %v473 = vpack.c.bf16 %v466, %v466
        %v474 = vld [vmem:[%s3] sm:$0xf]
        %v475 = vld [vmem:[%s3 + $0x4] sm:$0xf]
        %v476 = vld [vmem:[%s4] sm:$0x1]
        %v478 = vlaneseq
        %v479 = vshrl.u32 %v478, 7
        %v480 = vsub.s32 0, %v479
        %v481 = vrot.slane %v476, %v480
        %v485 = vunpack.c.l.b16 %v474
        %v486 = vunpack.c.l.b16 %v475
        %v487 = vpack.c.b16 %v486, %v485
        %vm489 = vcmask 130048
        %v491 = vsel %vm489, %v467, 0
        %v494 = vsel %vm489, %v468, 0
        %v497 = vsel %vm489, %v469, 0
        %v500 = vsel %vm489, %v470, 0
        %v503 = vsel %vm489, %v471, 0
        %v506 = vsel %vm489, %v472, 0
        %v509 = vsel %vm489, %v473, 0
        %511 = vmatprep.subr.bf16.mxu0 0
        %512 = vmatpush1.bf16.msra.mxu0 %v487
        %513 = vmatprep.subr.bf16.mxu0 0
        %514 = vmatpush1.bf16.msra.mxu0 0
        %515 = vmatprep.subr.bf16.mxu0 0
        %516 = vmatpush1.bf16.msra.mxu0 0
        %517 = vmatprep.subr.bf16.mxu0 0
        %518 = vmatpush1.bf16.msra.mxu0 0
        %519 = vmatprep.subr.bf16.mxu0 0
        %520 = vmatpush1.bf16.msra.mxu0 0
        %521 = vmatprep.subr.bf16.mxu0 0
        %522 = vmatpush1.bf16.msra.mxu0 0
        %523 = vmatprep.subr.bf16.mxu0 0
        %524 = vmatpush1.bf16.msra.mxu0 0
        %525 = vmatprep.subr.bf16.mxu0 0
        %526 = vmatpush1.bf16.msra.mxu0 0
        %527 = vmatprep.subr.bf16.mxu0 0
        %528 = vmatpush1.bf16.msra.mxu0 0
        %529 = vmatprep.subr.bf16.mxu0 0
        %530 = vmatpush1.bf16.msra.mxu0 0
        %531 = vmatprep.subr.bf16.mxu0 0
        %532 = vmatpush1.bf16.msra.mxu0 0
        %533 = vmatprep.subr.bf16.mxu0 0
        %534 = vmatpush1.bf16.msra.mxu0 0
        %535 = vmatprep.subr.bf16.mxu0 0
        %536 = vmatpush1.bf16.msra.mxu0 0
        %537 = vmatprep.subr.bf16.mxu0 0
        %538 = vmatpush1.bf16.msra.mxu0 0
        %539 = vmatprep.subr.bf16.mxu0 0
        %540 = vmatpush1.bf16.msra.mxu0 0
        %541 = vmatprep.subr.bf16.mxu0 0
        %542 = vmatpush1.bf16.msra.mxu0 0
        %543 = vmatprep.mubr.bf16.mxu0 0
        %544 = vmatmul.mubr.bf16.gmra.mrb[0].mxu0 %v491
        %v545 = vpop.f32.mrb[0].mxu0
        %v546 = vadd.f32 %v481, %v545
        %v547 = vpop.f32.mrb[0].mxu0
        %v548 = vpop.f32.mrb[0].mxu0
        %v549 = vadd.f32 %v481, %v548
        %v550 = vpop.f32.mrb[0].mxu0
        %551 = vmatprep.mubr.bf16.mxu0 0
        %552 = vmatmul.mubr.bf16.gmra.mrb[0].mxu0 %v494
        %v553 = vpop.f32.mrb[0].mxu0
        %v554 = vadd.f32 %v481, %v553
        %v555 = vpop.f32.mrb[0].mxu0
        %v556 = vpop.f32.mrb[0].mxu0
        %v557 = vadd.f32 %v481, %v556
        %v558 = vpop.f32.mrb[0].mxu0
        %559 = vmatprep.mubr.bf16.mxu0 0
        %560 = vmatmul.mubr.bf16.gmra.mrb[0].mxu0 %v497
        %v561 = vpop.f32.mrb[0].mxu0
        %v562 = vadd.f32 %v481, %v561
        %v563 = vpop.f32.mrb[0].mxu0
        %v564 = vpop.f32.mrb[0].mxu0
        %v565 = vadd.f32 %v481, %v564
        %v566 = vpop.f32.mrb[0].mxu0
        %567 = vmatprep.mubr.bf16.mxu0 0
        %568 = vmatmul.mubr.bf16.gmra.mrb[0].mxu0 %v500
        %v569 = vpop.f32.mrb[0].mxu0
        %v570 = vadd.f32 %v481, %v569
        %v571 = vpop.f32.mrb[0].mxu0
        %v572 = vpop.f32.mrb[0].mxu0
        %v573 = vadd.f32 %v481, %v572
        %v574 = vpop.f32.mrb[0].mxu0
        %575 = vmatprep.mubr.bf16.mxu0 0
        %576 = vmatmul.mubr.bf16.gmra.mrb[0].mxu0 %v503
        %v577 = vpop.f32.mrb[0].mxu0
        %v578 = vadd.f32 %v481, %v577
        %v579 = vpop.f32.mrb[0].mxu0
        %v580 = vpop.f32.mrb[0].mxu0
        %v581 = vadd.f32 %v481, %v580
        %v582 = vpop.f32.mrb[0].mxu0
        %583 = vmatprep.mubr.bf16.mxu0 0
        %584 = vmatmul.mubr.bf16.gmra.mrb[0].mxu0 %v506
        %v585 = vpop.f32.mrb[0].mxu0
        %v586 = vadd.f32 %v481, %v585
        %v587 = vpop.f32.mrb[0].mxu0
        %v588 = vpop.f32.mrb[0].mxu0
        %v589 = vadd.f32 %v481, %v588
        %v590 = vpop.f32.mrb[0].mxu0
        %591 = vmatprep.mubr.bf16.mxu0 0
        %592 = vmatmul.mubr.bf16.gmra.mrb[0].mxu0 %v509
        %v593 = vpop.f32.mrb[0].mxu0
        %v594 = vadd.f32 %v481, %v593
        %v595 = vpop.f32.mrb[0].mxu0
        %v596 = vpop.f32.mrb[0].mxu0
        %v597 = vpop.f32.mrb[0].mxu0
        %598 = vdwg.mxu0
        %v599 = vmax.f32 %v546, 0.0
        %v600 = vmax.f32 %v549, 0.0
        %v601 = vmax.f32 %v554, 0.0
        %v602 = vmax.f32 %v557, 0.0
        %v603 = vmax.f32 %v562, 0.0
        %v604 = vmax.f32 %v565, 0.0
        %v605 = vmax.f32 %v570, 0.0
        %v606 = vmax.f32 %v573, 0.0
        %v607 = vmax.f32 %v578, 0.0
        %v608 = vmax.f32 %v581, 0.0
        %v609 = vmax.f32 %v586, 0.0
        %v610 = vmax.f32 %v589, 0.0
        %v611 = vmax.f32 %v594, 0.0
        %v612 = vpack.c.bf16 %v600, %v599
        %v613 = vpack.c.bf16 %v602, %v601
        %v614 = vpack.c.bf16 %v604, %v603
        %v615 = vpack.c.bf16 %v606, %v605
        %v616 = vpack.c.bf16 %v608, %v607
        %v617 = vpack.c.bf16 %v610, %v609
        %v618 = vpack.c.bf16 %v611, %v611
        %v619 = vld [vmem:[%s5] sm:$0xf]
        %v620 = vld [vmem:[%s6] sm:$0x1]
        %v622 = vlaneseq
        %v623 = vshrl.u32 %v622, 7
        %v624 = vsub.s32 0, %v623
        %v625 = vrot.slane %v620, %v624
        %vm627 = vcmask 64512
        %v629 = vsel %vm627, %v612, 0
        %v632 = vsel %vm627, %v613, 0
        %v635 = vsel %vm627, %v614, 0
        %v638 = vsel %vm627, %v615, 0
        %v641 = vsel %vm627, %v616, 0
        %v644 = vsel %vm627, %v617, 0
        %v647 = vsel %vm627, %v618, 0
        %vm649 = vcmask 1043456
        %v651 = vsel %vm649, %v619, 0
        %653 = vmatprep.subr.bf16.mxu0 0
        %654 = vmatpush1.bf16.msra.mxu0 %v651
        %655 = vmatprep.subr.bf16.mxu0 0
        %656 = vmatpush1.bf16.msra.mxu0 0
        %657 = vmatprep.subr.bf16.mxu0 0
        %658 = vmatpush1.bf16.msra.mxu0 0
        %659 = vmatprep.subr.bf16.mxu0 0
        %660 = vmatpush1.bf16.msra.mxu0 0
        %661 = vmatprep.subr.bf16.mxu0 0
        %662 = vmatpush1.bf16.msra.mxu0 0
        %663 = vmatprep.subr.bf16.mxu0 0
        %664 = vmatpush1.bf16.msra.mxu0 0
        %665 = vmatprep.subr.bf16.mxu0 0
        %666 = vmatpush1.bf16.msra.mxu0 0
        %667 = vmatprep.subr.bf16.mxu0 0
        %668 = vmatpush1.bf16.msra.mxu0 0
        %669 = vmatprep.subr.bf16.mxu0 0
        %670 = vmatpush1.bf16.msra.mxu0 0
        %671 = vmatprep.subr.bf16.mxu0 0
        %672 = vmatpush1.bf16.msra.mxu0 0
        %673 = vmatprep.subr.bf16.mxu0 0
        %674 = vmatpush1.bf16.msra.mxu0 0
        %675 = vmatprep.subr.bf16.mxu0 0
        %676 = vmatpush1.bf16.msra.mxu0 0
        %677 = vmatprep.subr.bf16.mxu0 0
        %678 = vmatpush1.bf16.msra.mxu0 0
        %679 = vmatprep.subr.bf16.mxu0 0
        %680 = vmatpush1.bf16.msra.mxu0 0
        %681 = vmatprep.subr.bf16.mxu0 0
        %682 = vmatpush1.bf16.msra.mxu0 0
        %683 = vmatprep.subr.bf16.mxu0 0
        %684 = vmatpush1.bf16.msra.mxu0 0
        %685 = vmatprep.mubr.bf16.mxu0 0
        %686 = vmatmul.mubr.bf16.gmra.mrb[0].mxu0 %v629
        %v687 = vpop.f32.mrb[0].mxu0
        %v688 = vadd.f32 %v625, %v687
        %v689 = vpop.f32.mrb[0].mxu0
        %v690 = vpop.f32.mrb[0].mxu0
        %v691 = vadd.f32 %v625, %v690
        %v692 = vpop.f32.mrb[0].mxu0
        %693 = vmatprep.mubr.bf16.mxu0 0
        %694 = vmatmul.mubr.bf16.gmra.mrb[0].mxu0 %v632
        %v695 = vpop.f32.mrb[0].mxu0
        %v696 = vadd.f32 %v625, %v695
        %v697 = vpop.f32.mrb[0].mxu0
        %v698 = vpop.f32.mrb[0].mxu0
        %v699 = vadd.f32 %v625, %v698
        %v700 = vpop.f32.mrb[0].mxu0
        %701 = vmatprep.mubr.bf16.mxu0 0
        %702 = vmatmul.mubr.bf16.gmra.mrb[0].mxu0 %v635
        %v703 = vpop.f32.mrb[0].mxu0
        %v704 = vadd.f32 %v625, %v703
        %v705 = vpop.f32.mrb[0].mxu0
        %v706 = vpop.f32.mrb[0].mxu0
        %v707 = vadd.f32 %v625, %v706
        %v708 = vpop.f32.mrb[0].mxu0
        %709 = vmatprep.mubr.bf16.mxu0 0
        %710 = vmatmul.mubr.bf16.gmra.mrb[0].mxu0 %v638
        %v711 = vpop.f32.mrb[0].mxu0
        %v712 = vadd.f32 %v625, %v711
        %v713 = vpop.f32.mrb[0].mxu0
        %v714 = vpop.f32.mrb[0].mxu0
        %v715 = vadd.f32 %v625, %v714
        %v716 = vpop.f32.mrb[0].mxu0
        %717 = vmatprep.mubr.bf16.mxu0 0
        %718 = vmatmul.mubr.bf16.gmra.mrb[0].mxu0 %v641
        %v719 = vpop.f32.mrb[0].mxu0
        %v720 = vadd.f32 %v625, %v719
        %v721 = vpop.f32.mrb[0].mxu0
        %v722 = vpop.f32.mrb[0].mxu0
        %v723 = vadd.f32 %v625, %v722
        %v724 = vpop.f32.mrb[0].mxu0
        %725 = vmatprep.mubr.bf16.mxu0 0
        %726 = vmatmul.mubr.bf16.gmra.mrb[0].mxu0 %v644
        %v727 = vpop.f32.mrb[0].mxu0
        %v728 = vadd.f32 %v625, %v727
        %v729 = vpop.f32.mrb[0].mxu0
        %v730 = vpop.f32.mrb[0].mxu0
        %v731 = vadd.f32 %v625, %v730
        %v732 = vpop.f32.mrb[0].mxu0
        %733 = vmatprep.mubr.bf16.mxu0 0
        %734 = vmatmul.mubr.bf16.gmra.mrb[0].mxu0 %v647
        %v735 = vpop.f32.mrb[0].mxu0
        %v736 = vadd.f32 %v625, %v735
        %v737 = vpop.f32.mrb[0].mxu0
        %v738 = vpop.f32.mrb[0].mxu0
        %v739 = vpop.f32.mrb[0].mxu0
        %740 = vdwg.mxu0
        %vm741 = vcmask 31744
        %742 = vst.msk [vmem:[%s280] sm:$0xff] %vm741, %v688
        %743 = vst.msk [vmem:[%s280 + $0x8] sm:$0xff] %vm741, %v691
        %744 = vst.msk [vmem:[%s280 + $0x10] sm:$0xff] %vm741, %v696
        %745 = vst.msk [vmem:[%s280 + $0x18] sm:$0xff] %vm741, %v699
        %746 = vst.msk [vmem:[%s280 + $0x20] sm:$0xff] %vm741, %v704
        %747 = vst.msk [vmem:[%s280 + $0x28] sm:$0xff] %vm741, %v707
        %748 = vst.msk [vmem:[%s280 + $0x30] sm:$0xff] %vm741, %v712
        %749 = vst.msk [vmem:[%s280 + $0x38] sm:$0xff] %vm741, %v715
        %750 = vst.msk [vmem:[%s280 + $0x40] sm:$0xff] %vm741, %v720
        %751 = vst.msk [vmem:[%s280 + $0x48] sm:$0xff] %vm741, %v723
        %752 = vst.msk [vmem:[%s280 + $0x50] sm:$0xff] %vm741, %v728
        %753 = vst.msk [vmem:[%s280 + $0x58] sm:$0xff] %vm741, %v731
        %754 = vst.msk [vmem:[%s280 + $0x60] sm:$0xff] %vm741, %v736
        %s755 = sand.u32 %s178, 1
        %s756 = sand.u32 %s178, 1
        %s757 = smul.addr %s756, 104
        %s758 = scalar_lea.vmem [#allocation2], %s757
        // Predicated region
        $region49: #{tpu_custom_call.1} parent=47 // pred_check
          %p759 = pneg %p188
        $region50: #{tpu_custom_call.1} parent=47 // pred_check_branch
          %761 = sbr.rel (%p759) target = $region52
        $region51: #{tpu_custom_call.1} parent=47 // pred_region
          %s762 = smul.u32 13, %s18
          %s763 = ssub.s32 25, %s762
          %p764 = scmp.lt.s32.totalorder %s763, 13
          %s765 = scalar_select %p764, %s763, 13
          %s766 = smul.u32 128, %s765
          %p767 = scmp.ne.s32.totalorder 0, %s766
          %s768 = smul.addr %s762, 8
          %s769 = scalar_lea.vmem %s7, %s768
          // Predicated region
          $region53: #{tpu_custom_call.1} parent=51 // pred_check
            %p770 = pneg %p767
          $region54: #{tpu_custom_call.1} parent=51 // pred_check_branch
            %772 = sbr.rel (%p770) target = $region56
          $region55: #{tpu_custom_call.1} parent=51 // pred_region
            // Predicated region
            $region57: #{tpu_custom_call.1} parent=55 // pred_check
              _
            $region58: #{tpu_custom_call.1} parent=55 // pred_check_branch
              %774 = sbr.rel (0) target = $region60
            $region59: #{tpu_custom_call.1} parent=55 // pred_region
              // Predicated region
              $region79: #{tpu_custom_call.1} parent=59 // pred_check
                _
              $region80: #{tpu_custom_call.1} parent=59 // pred_check_branch
                %848 = sbr.rel (0) target = $region82
              $region81: #{tpu_custom_call.1} parent=59 // pred_region
                %s849 = sdiv.u32.pop %s765, 13
                %s850 = srem.u32.pop %s765, 13
                // While loop
                $region83: #{tpu_custom_call.1} parent=81 // loop_pre_header
                  _
                $region84: #{tpu_custom_call.1} parent=81 // loop_header
                  %s852 = sphi 0, %s854
                  %p853 = scmp.ge.s32.totalorder %s852, %s849
                  %s857 = sphi 0, %s888
                  %s858 = sphi %s758, %s891
                  %s859 = sphi %s769, %s892
                $region85: #{tpu_custom_call.1} parent=81 // loop_header_branch
                  %856 = sbr.rel (%p853) target = $region89
                $region86: #{tpu_custom_call.1} parent=81 // loop_body
                  %v860 = vld [vmem:[%s858] sm:$0xff]
                  %861 = vst [vmem:[%s859] sm:$0xff] %v860
                  %v862 = vld [vmem:[%s858 + $0x8] sm:$0xff]
                  %863 = vst [vmem:[%s859 + $0x8] sm:$0xff] %v862
                  %v864 = vld [vmem:[%s858 + $0x10] sm:$0xff]
                  %865 = vst [vmem:[%s859 + $0x10] sm:$0xff] %v864
                  %v866 = vld [vmem:[%s858 + $0x18] sm:$0xff]
                  %867 = vst [vmem:[%s859 + $0x18] sm:$0xff] %v866
                  %v868 = vld [vmem:[%s858 + $0x20] sm:$0xff]
                  %869 = vst [vmem:[%s859 + $0x20] sm:$0xff] %v868
                  %v870 = vld [vmem:[%s858 + $0x28] sm:$0xff]
                  %871 = vst [vmem:[%s859 + $0x28] sm:$0xff] %v870
                  %v872 = vld [vmem:[%s858 + $0x30] sm:$0xff]
                  %873 = vst [vmem:[%s859 + $0x30] sm:$0xff] %v872
                  %v874 = vld [vmem:[%s858 + $0x38] sm:$0xff]
                  %875 = vst [vmem:[%s859 + $0x38] sm:$0xff] %v874
                  %v876 = vld [vmem:[%s858 + $0x40] sm:$0xff]
                  %877 = vst [vmem:[%s859 + $0x40] sm:$0xff] %v876
                  %v878 = vld [vmem:[%s858 + $0x48] sm:$0xff]
                  %879 = vst [vmem:[%s859 + $0x48] sm:$0xff] %v878
                  %v880 = vld [vmem:[%s858 + $0x50] sm:$0xff]
                  %881 = vst [vmem:[%s859 + $0x50] sm:$0xff] %v880
                  %v882 = vld [vmem:[%s858 + $0x58] sm:$0xff]
                  %883 = vst [vmem:[%s859 + $0x58] sm:$0xff] %v882
                  %v884 = vld [vmem:[%s858 + $0x60] sm:$0xff]
                  %885 = vst [vmem:[%s859 + $0x60] sm:$0xff] %v884
                  %s886 = sadd.s32 1, %s857
                  %p887 = scmp.ge.s32.totalorder %s886, %s849
                  %s888 = scalar_select %p887, 0, %s886
                  %s889 = smul.u32 %s888, 104
                  %s890 = smul.u32 %s888, 104
                  %s891 = scalar_lea.vmem %s758, %s889 [#allocation2]
                  %s892 = scalar_lea.vmem %s769, %s890
                $region87: #{tpu_custom_call.1} parent=81 // loop_footer
                  %s854 = sadd.s32 %s852, 1
                $region88: #{tpu_custom_call.1} parent=81 // loop_footer_branch
                  %851 = sbr.rel target = $region84
                $region89: #{tpu_custom_call.1} parent=81 // loop_exit
                  _
                %s893 = sdiv.u32.pop %s765, 13
                %s894 = srem.u32.pop %s765, 13
                %s895 = smul.u32 %s893, 13
                %s896 = smul.u32 8, %s895
                %s897 = scalar_lea.vmem %s758, %s896 [#allocation2]
                %s898 = smul.u32 8, %s895
                %s899 = scalar_lea.vmem %s769, %s898
                // While loop
                $region90: #{tpu_custom_call.1} parent=81 // loop_pre_header
                  _
                $region91: #{tpu_custom_call.1} parent=81 // loop_header
                  %s901 = sphi 0, %s903
                  %p902 = scmp.ge.s32.totalorder %s901, %s894
                  %s906 = sphi 0, %s913
                  %s907 = sphi %s897, %s916
                  %s908 = sphi %s899, %s917
                $region92: #{tpu_custom_call.1} parent=81 // loop_header_branch
                  %905 = sbr.rel (%p902) target = $region96
                $region93: #{tpu_custom_call.1} parent=81 // loop_body
                  %v909 = vld [vmem:[%s907] sm:$0xff]
                  %910 = vst [vmem:[%s908] sm:$0xff] %v909
                  %s911 = sadd.s32 1, %s906
                  %p912 = scmp.ge.s32.totalorder %s911, %s894
                  %s913 = scalar_select %p912, 0, %s911
                  %s914 = smul.u32 %s913, 8
                  %s915 = smul.u32 %s913, 8
                  %s916 = scalar_lea.vmem %s897, %s914 [#allocation2]
                  %s917 = scalar_lea.vmem %s899, %s915
                $region94: #{tpu_custom_call.1} parent=81 // loop_footer
                  %s903 = sadd.s32 %s901, 1
                $region95: #{tpu_custom_call.1} parent=81 // loop_footer_branch
                  %900 = sbr.rel target = $region91
                $region96: #{tpu_custom_call.1} parent=81 // loop_exit
                  _
              $region82: #{tpu_custom_call.1} parent=59 // pred_fallthru
                _
              // Predicated region
              $region97: #{tpu_custom_call.1} parent=59 // pred_check
                _
              $region98: #{tpu_custom_call.1} parent=59 // pred_check_branch
                %919 = sbr.rel target = $region100
              $region99: #{tpu_custom_call.1} parent=59 // pred_region
                _
              $region100: #{tpu_custom_call.1} parent=59 // pred_fallthru
                _
            $region60: #{tpu_custom_call.1} parent=55 // pred_fallthru
              _
            // Predicated region
            $region61: #{tpu_custom_call.1} parent=55 // pred_check
              _
            $region62: #{tpu_custom_call.1} parent=55 // pred_check_branch
              %776 = sbr.rel target = $region64
            $region63: #{tpu_custom_call.1} parent=55 // pred_region
              %s778 = sdiv.u32.pop %s765, 13
              %s779 = srem.u32.pop %s765, 13
              // While loop
              $region65: #{tpu_custom_call.1} parent=63 // loop_pre_header
                _
              $region66: #{tpu_custom_call.1} parent=63 // loop_header
                %s781 = sphi 0, %s783
                %p782 = scmp.ge.s32.totalorder %s781, %s778
                %s786 = sphi 0, %s817
                %s787 = sphi %s758, %s820
                %s788 = sphi %s769, %s821
              $region67: #{tpu_custom_call.1} parent=63 // loop_header_branch
                %785 = sbr.rel (%p782) target = $region71
              $region68: #{tpu_custom_call.1} parent=63 // loop_body
                %v789 = vld [vmem:[%s787] sm:$0xff]
                %790 = vst [vmem:[%s788] sm:$0xff] %v789
                %v791 = vld [vmem:[%s787 + $0x8] sm:$0xff]
                %792 = vst [vmem:[%s788 + $0x8] sm:$0xff] %v791
                %v793 = vld [vmem:[%s787 + $0x10] sm:$0xff]
                %794 = vst [vmem:[%s788 + $0x10] sm:$0xff] %v793
                %v795 = vld [vmem:[%s787 + $0x18] sm:$0xff]
                %796 = vst [vmem:[%s788 + $0x18] sm:$0xff] %v795
                %v797 = vld [vmem:[%s787 + $0x20] sm:$0xff]
                %798 = vst [vmem:[%s788 + $0x20] sm:$0xff] %v797
                %v799 = vld [vmem:[%s787 + $0x28] sm:$0xff]
                %800 = vst [vmem:[%s788 + $0x28] sm:$0xff] %v799
                %v801 = vld [vmem:[%s787 + $0x30] sm:$0xff]
                %802 = vst [vmem:[%s788 + $0x30] sm:$0xff] %v801
                %v803 = vld [vmem:[%s787 + $0x38] sm:$0xff]
                %804 = vst [vmem:[%s788 + $0x38] sm:$0xff] %v803
                %v805 = vld [vmem:[%s787 + $0x40] sm:$0xff]
                %806 = vst [vmem:[%s788 + $0x40] sm:$0xff] %v805
                %v807 = vld [vmem:[%s787 + $0x48] sm:$0xff]
                %808 = vst [vmem:[%s788 + $0x48] sm:$0xff] %v807
                %v809 = vld [vmem:[%s787 + $0x50] sm:$0xff]
                %810 = vst [vmem:[%s788 + $0x50] sm:$0xff] %v809
                %v811 = vld [vmem:[%s787 + $0x58] sm:$0xff]
                %812 = vst [vmem:[%s788 + $0x58] sm:$0xff] %v811
                %v813 = vld [vmem:[%s787 + $0x60] sm:$0xff]
                %814 = vst [vmem:[%s788 + $0x60] sm:$0xff] %v813
                %s815 = sadd.s32 1, %s786
                %p816 = scmp.ge.s32.totalorder %s815, %s778
                %s817 = scalar_select %p816, 0, %s815
                %s818 = smul.u32 %s817, 104
                %s819 = smul.u32 %s817, 104
                %s820 = scalar_lea.vmem %s758, %s818 [#allocation2]
                %s821 = scalar_lea.vmem %s769, %s819
              $region69: #{tpu_custom_call.1} parent=63 // loop_footer
                %s783 = sadd.s32 %s781, 1
              $region70: #{tpu_custom_call.1} parent=63 // loop_footer_branch
                %780 = sbr.rel target = $region66
              $region71: #{tpu_custom_call.1} parent=63 // loop_exit
                _
              %s822 = sdiv.u32.pop %s765, 13
              %s823 = srem.u32.pop %s765, 13
              %s824 = smul.u32 %s822, 13
              %s825 = smul.u32 8, %s824
              %s826 = scalar_lea.vmem %s758, %s825 [#allocation2]
              %s827 = smul.u32 8, %s824
              %s828 = scalar_lea.vmem %s769, %s827
              // While loop
              $region72: #{tpu_custom_call.1} parent=63 // loop_pre_header
                _
              $region73: #{tpu_custom_call.1} parent=63 // loop_header
                %s830 = sphi 0, %s832
                %p831 = scmp.ge.s32.totalorder %s830, %s823
                %s835 = sphi 0, %s842
                %s836 = sphi %s826, %s845
                %s837 = sphi %s828, %s846
              $region74: #{tpu_custom_call.1} parent=63 // loop_header_branch
                %834 = sbr.rel (%p831) target = $region78
              $region75: #{tpu_custom_call.1} parent=63 // loop_body
                %v838 = vld [vmem:[%s836] sm:$0xff]
                %839 = vst [vmem:[%s837] sm:$0xff] %v838
                %s840 = sadd.s32 1, %s835
                %p841 = scmp.ge.s32.totalorder %s840, %s823
                %s842 = scalar_select %p841, 0, %s840
                %s843 = smul.u32 %s842, 8
                %s844 = smul.u32 %s842, 8
                %s845 = scalar_lea.vmem %s826, %s843 [#allocation2]
                %s846 = scalar_lea.vmem %s828, %s844
              $region76: #{tpu_custom_call.1} parent=63 // loop_footer
                %s832 = sadd.s32 %s830, 1
              $region77: #{tpu_custom_call.1} parent=63 // loop_footer_branch
                %829 = sbr.rel target = $region73
              $region78: #{tpu_custom_call.1} parent=63 // loop_exit
                _
            $region64: #{tpu_custom_call.1} parent=55 // pred_fallthru
              _
          $region56: #{tpu_custom_call.1} parent=51 // pred_fallthru
            _
          %920 = vnop
        $region52: #{tpu_custom_call.1} parent=47 // pred_fallthru
          _
      $region48: #{tpu_custom_call.1} parent=5 // pred_fallthru
        _
      %p921 = scmp.le.s32.totalorder 2, %s13
      // Predicated region
      $region101: #{tpu_custom_call.1} parent=5 // pred_check
        %p922 = pneg %p921
      $region102: #{tpu_custom_call.1} parent=5 // pred_check_branch
        %924 = sbr.rel (%p922) target = $region104
      $region103: #{tpu_custom_call.1} parent=5 // pred_region
        %s925 = ssub.s32 %s13, 2
        // Predicated region
        $region105: #{tpu_custom_call.1} parent=103 // pred_check
          %p926 = pneg %p194
        $region106: #{tpu_custom_call.1} parent=103 // pred_check_branch
          %928 = sbr.rel (%p926) target = $region108
        $region107: #{tpu_custom_call.1} parent=103 // pred_region
          %s929 = sand.u32 %s179, 1
          %s930 = sand.u32 %s179, 1
          %s931 = smul.addr %s930, 104
          %s932 = scalar_lea.vmem [#allocation2], %s931
        $region108: #{tpu_custom_call.1} parent=103 // pred_fallthru
          _
      $region104: #{tpu_custom_call.1} parent=5 // pred_fallthru
        _
    $region6: #{tpu_custom_call.1} parent=1 // loop_footer
      %s17 = sadd.s32 1, %s13
    $region7: #{tpu_custom_call.1} parent=1 // loop_footer_branch
      %12 = sbr.rel target = $region3
    $region8: #{tpu_custom_call.1} parent=1 // loop_exit
      _

</llo_original>
